<compile_context>
chip_gen: v7x
topology: tpu7x:2x2x1
jax: 0.10.0
libtpu: 0.0.40
codegen_flags: <defaults>
</compile_context>

<pallas_src>
import jax
import jax.numpy as jnp
from jax.experimental import pallas as pl
from jax.experimental.pallas import tpu as pltpu

INPUT_DIM = 8
HIDDEN = 32     # config.json 'agent.hidden_unit' (synthetic, deterministic)
OUT_DIM = 2
TILE_B = 256    # batch tile on the lane axis; multiple of 128, tiny vs VMEM (v7x-safe)


def qnet_kernel(x_ref, w1_ref, b1_ref, w2_ref, b2_ref, w3_ref, b3_ref, o_ref):
    # fc1 + relu :  (H, in) @ (in, B_tile) -> (H, B_tile), f32 accumulate on MXU
    h1 = jnp.dot(w1_ref[...], x_ref[...], preferred_element_type=jnp.float32)
    h1 = jnp.maximum(h1 + b1_ref[...], 0.0)
    # fc2 + relu
    h2 = jnp.dot(w2_ref[...], h1.astype(jnp.bfloat16),
                 preferred_element_type=jnp.float32)
    h2 = jnp.maximum(h2 + b2_ref[...], 0.0)
    # fc3 (no activation); output (2, B_tile) is lane-dense -> unmasked stores
    out = jnp.dot(w3_ref[...], h2.astype(jnp.bfloat16),
                  preferred_element_type=jnp.float32)
    o_ref[...] = (out + b3_ref[...]).astype(o_ref.dtype)


def qnet_forward(x, params, tile_b=TILE_B):
    """x: (B, INPUT_DIM) float32  ->  (B, OUT_DIM) float32."""
    w1, b1, w2, b2, w3, b3 = params
    B = x.shape[0]
    num_tiles = -(-B // tile_b)
    Bp = num_tiles * tile_b

    # Transpose once in the wrapper (batch -> lanes) and cast activations to bf16.
    xt = x.T.astype(jnp.bfloat16)                      # (INPUT_DIM, B)
    if Bp != B:
        xt = jnp.pad(xt, ((0, 0), (0, Bp - B)))        # zero-pad batch (relu-safe)

    # Weights/biases: full-array blocks with constant index_map -> resident in VMEM.
    resident = lambda a: pl.BlockSpec(a.shape, lambda i: (0, 0))

    out_t = pl.pallas_call(
        qnet_kernel,
        out_shape=jax.ShapeDtypeStruct((OUT_DIM, Bp), jnp.float32),
        grid=(num_tiles,),
        in_specs=[
            pl.BlockSpec((INPUT_DIM, tile_b), lambda i: (0, i)),   # x batch tile
            resident(w1), resident(b1),
            resident(w2), resident(b2),
            resident(w3), resident(b3),
        ],
        out_specs=pl.BlockSpec((OUT_DIM, tile_b), lambda i: (0, i)),
        compiler_params=pltpu.CompilerParams(
            dimension_semantics=("parallel",)),        # shard batch tiles over TCs
    )(xt, w1, b1, w2, b2, w3, b3)

    return out_t[:, :B].T                              # back to (B, OUT_DIM)


def init_params(key):
    """Deterministic synthetic parameters, nn.Linear-style init.
    Weights kept in PyTorch-native (out, in) layout, cast to bf16 for the MXU;
    biases stay f32 with shape (out, 1) (per-sublane, lane-broadcast in kernel)."""
    ks = jax.random.split(key, 6)

    def lin(kw, kb, fan_in, fan_out):
        bound = 1.0 / jnp.sqrt(fan_in)
        w = jax.random.uniform(kw, (fan_out, fan_in), jnp.float32, -bound, bound)
        b = jax.random.uniform(kb, (fan_out, 1), jnp.float32, -bound, bound)
        return w.astype(jnp.bfloat16), b

    w1, b1 = lin(ks[0], ks[1], INPUT_DIM, HIDDEN)
    w2, b2 = lin(ks[2], ks[3], HIDDEN, HIDDEN)
    w3, b3 = lin(ks[4], ks[5], HIDDEN, OUT_DIM)
    return (w1, b1, w2, b2, w3, b3)


def qnet_ref(x, params):
    """Pure-JAX reference with the same bf16 rounding points as the kernel."""
    w1, b1, w2, b2, w3, b3 = params
    f32 = lambda a: a.astype(jnp.float32)
    bf = lambda a: a.astype(jnp.bfloat16).astype(jnp.float32)
    h1 = jnp.maximum(bf(x) @ f32(w1).T + b1.T, 0.0)
    h2 = jnp.maximum(bf(h1) @ f32(w2).T + b2.T, 0.0)
    return bf(h2) @ f32(w3).T + b3.T


if __name__ == "__main__":
    key = jax.random.PRNGKey(0)
    kx, kp = jax.random.split(key)
    batch = 512                      # 2 batch tiles of 256 -> exercises the grid
    x = jax.random.normal(kx, (batch, INPUT_DIM), jnp.float32)
    params = init_params(kp)

    out = qnet_forward(x, params)
    jax.block_until_ready(out)

    ref = qnet_ref(x, params)
    assert out.shape == (batch, OUT_DIM)
    assert jnp.allclose(out, ref, atol=1e-4, rtol=1e-4), \
        f"max abs err = {float(jnp.max(jnp.abs(out - ref)))}"
    print("KERNEL_OK")
</pallas_src>

<mosaic_0001>
module attributes {stable_mosaic.version = 11 : i64} {
  func.func @qnet_kernel(%arg0: i32, %arg1: memref<8x256xbf16, #tpu.memory_space<vmem>>, %arg2: memref<32x8xbf16, #tpu.memory_space<vmem>>, %arg3: memref<32x1xf32, #tpu.memory_space<vmem>>, %arg4: memref<32x32xbf16, #tpu.memory_space<vmem>>, %arg5: memref<32x1xf32, #tpu.memory_space<vmem>>, %arg6: memref<2x32xbf16, #tpu.memory_space<vmem>>, %arg7: memref<2x1xf32, #tpu.memory_space<vmem>>, %arg8: memref<2x256xf32, #tpu.memory_space<vmem>>) attributes {dimension_semantics = [#tpu.dimension_semantics<parallel>], iteration_bounds = array<i64: 2>, scalar_prefetch = 0 : i64, scratch_operands = 0 : i64, tpu.core_type = #tpu.core_type<tc>, window_params = [{transform_indices = @transform_0, window_bounds = array<i64: 8, 256>}, {pipeline_mode = #tpu.pipeline_mode<synchronous>, transform_indices = @transform_1, window_bounds = array<i64: 32, 8>}, {pipeline_mode = #tpu.pipeline_mode<synchronous>, transform_indices = @transform_2, window_bounds = array<i64: 32, 1>}, {pipeline_mode = #tpu.pipeline_mode<synchronous>, transform_indices = @transform_3, window_bounds = array<i64: 32, 32>}, {pipeline_mode = #tpu.pipeline_mode<synchronous>, transform_indices = @transform_4, window_bounds = array<i64: 32, 1>}, {pipeline_mode = #tpu.pipeline_mode<synchronous>, transform_indices = @transform_5, window_bounds = array<i64: 2, 32>}, {pipeline_mode = #tpu.pipeline_mode<synchronous>, transform_indices = @transform_6, window_bounds = array<i64: 2, 1>}, {transform_indices = @transform_7, window_bounds = array<i64: 2, 256>}]} {
    %c0 = arith.constant 0 : index
    %c0_0 = arith.constant 0 : index
    %0 = vector.load %arg2[%c0, %c0_0] : memref<32x8xbf16, #tpu.memory_space<vmem>>, vector<32x8xbf16>
    %c0_1 = arith.constant 0 : index
    %c0_2 = arith.constant 0 : index
    %1 = vector.load %arg1[%c0_1, %c0_2] : memref<8x256xbf16, #tpu.memory_space<vmem>>, vector<8x256xbf16>
    %cst = arith.constant dense<0.000000e+00> : vector<32x256xf32>
    %2 = tpu.matmul %0, %1, %cst {dimension_numbers = #tpu.dot_dimension_numbers<[1], [0], [0], [1], [0, 0, 1, 1], [], []>} : vector<32x8xbf16>, vector<8x256xbf16>, vector<32x256xf32> -> vector<32x256xf32>
    %c0_3 = arith.constant 0 : index
    %c0_4 = arith.constant 0 : index
    %3 = vector.load %arg3[%c0_3, %c0_4] : memref<32x1xf32, #tpu.memory_space<vmem>>, vector<32x1xf32>
    %4 = vector.broadcast %3 : vector<32x1xf32> to vector<32x256xf32>
    %5 = arith.addf %2, %4 : vector<32x256xf32>
    %cst_5 = arith.constant 0.000000e+00 : f32
    %6 = vector.broadcast %cst_5 : f32 to vector<32x256xf32>
    %7 = arith.maximumf %5, %6 : vector<32x256xf32>
    %c0_6 = arith.constant 0 : index
    %c0_7 = arith.constant 0 : index
    %8 = vector.load %arg4[%c0_6, %c0_7] : memref<32x32xbf16, #tpu.memory_space<vmem>>, vector<32x32xbf16>
    %9 = arith.truncf %7 : vector<32x256xf32> to vector<32x256xbf16>
    %cst_8 = arith.constant dense<0.000000e+00> : vector<32x256xf32>
    %10 = tpu.matmul %8, %9, %cst_8 {dimension_numbers = #tpu.dot_dimension_numbers<[1], [0], [0], [1], [0, 0, 1, 1], [], []>} : vector<32x32xbf16>, vector<32x256xbf16>, vector<32x256xf32> -> vector<32x256xf32>
    %c0_9 = arith.constant 0 : index
    %c0_10 = arith.constant 0 : index
    %11 = vector.load %arg5[%c0_9, %c0_10] : memref<32x1xf32, #tpu.memory_space<vmem>>, vector<32x1xf32>
    %12 = vector.broadcast %11 : vector<32x1xf32> to vector<32x256xf32>
    %13 = arith.addf %10, %12 : vector<32x256xf32>
    %cst_11 = arith.constant 0.000000e+00 : f32
    %14 = vector.broadcast %cst_11 : f32 to vector<32x256xf32>
    %15 = arith.maximumf %13, %14 : vector<32x256xf32>
    %c0_12 = arith.constant 0 : index
    %c0_13 = arith.constant 0 : index
    %16 = vector.load %arg6[%c0_12, %c0_13] : memref<2x32xbf16, #tpu.memory_space<vmem>>, vector<2x32xbf16>
    %17 = arith.truncf %15 : vector<32x256xf32> to vector<32x256xbf16>
    %cst_14 = arith.constant dense<0.000000e+00> : vector<2x256xf32>
    %18 = tpu.matmul %16, %17, %cst_14 {dimension_numbers = #tpu.dot_dimension_numbers<[1], [0], [0], [1], [0, 0, 1, 1], [], []>} : vector<2x32xbf16>, vector<32x256xbf16>, vector<2x256xf32> -> vector<2x256xf32>
    %c0_15 = arith.constant 0 : index
    %c0_16 = arith.constant 0 : index
    %19 = vector.load %arg7[%c0_15, %c0_16] : memref<2x1xf32, #tpu.memory_space<vmem>>, vector<2x1xf32>
    %20 = vector.broadcast %19 : vector<2x1xf32> to vector<2x256xf32>
    %21 = arith.addf %18, %20 : vector<2x256xf32>
    %c0_17 = arith.constant 0 : index
    %c0_18 = arith.constant 0 : index
    %22 = vector.load %arg8[%c0_17, %c0_18] : memref<2x256xf32, #tpu.memory_space<vmem>>, vector<2x256xf32>
    tpu.vector_store %arg8[%c0_17, %c0_18], %21 {strides = array<i32>} : memref<2x256xf32, #tpu.memory_space<vmem>>, vector<2x256xf32>,
    return
  }
  func.func @transform_0(%arg0: i32) -> (i32, i32) {
    %c0_i32 = arith.constant 0 : i32
    %c0_i32_0 = arith.constant 0 : i32
    return %c0_i32, %arg0 : i32, i32
  }
  func.func @transform_1(%arg0: i32) -> (i32, i32) {
    %c0_i32 = arith.constant 0 : i32
    %c0_i32_0 = arith.constant 0 : i32
    %c0_i32_1 = arith.constant 0 : i32
    return %c0_i32, %c0_i32_0 : i32, i32
  }
  func.func @transform_2(%arg0: i32) -> (i32, i32) {
    %c0_i32 = arith.constant 0 : i32
    %c0_i32_0 = arith.constant 0 : i32
    %c0_i32_1 = arith.constant 0 : i32
    return %c0_i32, %c0_i32_0 : i32, i32
  }
  func.func @transform_3(%arg0: i32) -> (i32, i32) {
    %c0_i32 = arith.constant 0 : i32
    %c0_i32_0 = arith.constant 0 : i32
    %c0_i32_1 = arith.constant 0 : i32
    return %c0_i32, %c0_i32_0 : i32, i32
  }
  func.func @transform_4(%arg0: i32) -> (i32, i32) {
    %c0_i32 = arith.constant 0 : i32
    %c0_i32_0 = arith.constant 0 : i32
    %c0_i32_1 = arith.constant 0 : i32
    return %c0_i32, %c0_i32_0 : i32, i32
  }
  func.func @transform_5(%arg0: i32) -> (i32, i32) {
    %c0_i32 = arith.constant 0 : i32
    %c0_i32_0 = arith.constant 0 : i32
    %c0_i32_1 = arith.constant 0 : i32
    return %c0_i32, %c0_i32_0 : i32, i32
  }
  func.func @transform_6(%arg0: i32) -> (i32, i32) {
    %c0_i32 = arith.constant 0 : i32
    %c0_i32_0 = arith.constant 0 : i32
    %c0_i32_1 = arith.constant 0 : i32
    return %c0_i32, %c0_i32_0 : i32, i32
  }
  func.func @transform_7(%arg0: i32) -> (i32, i32) {
    %c0_i32 = arith.constant 0 : i32
    %c0_i32_0 = arith.constant 0 : i32
    return %c0_i32, %arg0 : i32, i32
  }
}

</mosaic_0001>

<llo_original>
// kernel: tpu_custom_call.1
$region0: #{tpu_custom_call.1}
  #allocation0 [shape = 'u32[]', space=smem, size = 0x4, offset = 0x4, fixed_abs, tag = 'smem constant byte address 0x4 - core index']
  #allocation1 [shape = 'u32[144,128]{1,0:T(1,128)}', space=vmem, size = 0x12000, scoped, tag = 'internal scratch']
  %s0 = inlined_call_operand.vmem [shape: bf16[8,512], index: 0, kind: input, shape index: {}]
  %s1 = inlined_call_operand.vmem [shape: bf16[32,8], index: 1, kind: input, shape index: {}]
  %s2 = inlined_call_operand.vmem [shape: f32[32,1], index: 2, kind: input, shape index: {}]
  %s3 = inlined_call_operand.vmem [shape: bf16[32,32], index: 3, kind: input, shape index: {}]
  %s4 = inlined_call_operand.vmem [shape: f32[32,1], index: 4, kind: input, shape index: {}]
  %s5 = inlined_call_operand.vmem [shape: bf16[2,32], index: 5, kind: input, shape index: {}]
  %s6 = inlined_call_operand.vmem [shape: f32[2,1], index: 6, kind: input, shape index: {}]
  %s7 = inlined_call_operand.hbm [shape: f32[2,512], index: 7, kind: output, shape index: {}]
  %s8 = sld [smem:[#allocation0]]
  $region61: #{tpu_custom_call.1} parent=0
    _
  %s10 = ssub.s32 1, %s8
  %s11 = scalar_select 0, %s10, %s8
  $region1: #{tpu_custom_call.1} parent=0
    #allocation2 [shape = 'u8[4096]{0}', space=vmem, size = 0x1000, scoped, tag = 'output window, operand 0']
    #allocation3 [shape = 's32[2]{0}', space=sflag, size = 0x8, scoped, tag = 'scoped memory for tpu_custom_call.1']
    %12 = vsyncpa [#allocation3], 0
    %s13 = scalar_lea.sflag [#allocation3], 1
    %14 = vsyncpa %s13, 0
    loop: start=0, step=1, limit=4
    $region2: #{tpu_custom_call.1} parent=1 // loop_pre_header
      _
    $region3: #{tpu_custom_call.1} parent=1 // loop_header
      %s16 = sphi 0, %s20
      %p17 = scmp.ge.s32.totalorder %s16, 4
      %s26 = sphi 0, %s28
      %s29 = sphi 0, %s26
      %s30 = sphi 0, %s29
      %s46 = sphi 0, %s30
      %s50 = sphi 0, %s50
      %s52 = sphi 0, %s50
      %s53 = sphi 0, %s52
      %s67 = sphi 0, %s53
      %s71 = sphi 0, %s71
      %s73 = sphi 0, %s71
      %s74 = sphi 0, %s73
      %s88 = sphi 0, %s74
      %s92 = sphi 0, %s92
      %s94 = sphi 0, %s92
      %s95 = sphi 0, %s94
      %s109 = sphi 0, %s95
      %s113 = sphi 0, %s113
      %s115 = sphi 0, %s113
      %s116 = sphi 0, %s115
      %s130 = sphi 0, %s116
      %s134 = sphi 0, %s134
      %s136 = sphi 0, %s134
      %s137 = sphi 0, %s136
      %s151 = sphi 0, %s137
      %s155 = sphi 0, %s155
      %s157 = sphi 0, %s155
      %s158 = sphi 0, %s157
      %s172 = sphi 0, %s158
      %s178 = sphi 0, %s180
      %s181 = sphi 0, %s178
      %s182 = sphi 0, %s181
      %s198 = sphi 0, %s182
    $region4: #{tpu_custom_call.1} parent=1 // loop_header_branch
      %19 = sbr.rel (%p17) target = $region8
    $region5: #{tpu_custom_call.1} parent=1 // loop_body
      %s21 = ssub.s32 %s16, 1
      %s22 = ssub.s32 %s16, 2
      %s23 = sadd.s32 %s16, 1
      %s24 = ssub.s32 %s16, %s23
      %p25 = scmp.eq.s32.totalorder %s24, 0
      %s27 = sadd.s32 %s26, 1
      %s28 = scalar_select %p25, %s26, %s27
      %p31 = pneg %p25
      %p32 = scmp.eq.s32.totalorder %s16, 1
      %p33 = por %p31, %p32
      %p34 = scmp.ne.s32.totalorder %s26, %s29
      %p35 = scmp.eq.s32.totalorder %s16, 0
      %p36 = por %p34, %p35
      %p37 = scmp.ne.s32.totalorder %s26, %s29
      %p38 = scmp.eq.s32.totalorder %s21, 1
      %p39 = por %p37, %p38
      %p40 = scmp.ne.s32.totalorder %s29, %s30
      %p41 = scmp.eq.s32.totalorder %s21, 0
      %p42 = por %p40, %p41
      %p43 = scmp.ne.s32.totalorder %s29, %s30
      %p44 = scmp.eq.s32.totalorder %s22, 1
      %p45 = por %p43, %p44
      %p47 = scmp.ne.s32.totalorder %s30, %s46
      %p48 = scmp.eq.s32.totalorder %s22, 0
      %p49 = por %p47, %p48
      %s51 = sadd.s32 %s50, 1
      %p54 = scmp.eq.s32.totalorder %s16, 1
      %p55 = scmp.ne.s32.totalorder %s50, %s52
      %p56 = scmp.eq.s32.totalorder %s16, 0
      %p57 = por %p55, %p56
      %p58 = scmp.ne.s32.totalorder %s50, %s52
      %p59 = scmp.eq.s32.totalorder %s21, 1
      %p60 = por %p58, %p59
      %p61 = scmp.ne.s32.totalorder %s52, %s53
      %p62 = scmp.eq.s32.totalorder %s21, 0
      %p63 = por %p61, %p62
      %p64 = scmp.ne.s32.totalorder %s52, %s53
      %p65 = scmp.eq.s32.totalorder %s22, 1
      %p66 = por %p64, %p65
      %p68 = scmp.ne.s32.totalorder %s53, %s67
      %p69 = scmp.eq.s32.totalorder %s22, 0
      %p70 = por %p68, %p69
      %s72 = sadd.s32 %s71, 1
      %p75 = scmp.eq.s32.totalorder %s16, 1
      %p76 = scmp.ne.s32.totalorder %s71, %s73
      %p77 = scmp.eq.s32.totalorder %s16, 0
      %p78 = por %p76, %p77
      %p79 = scmp.ne.s32.totalorder %s71, %s73
      %p80 = scmp.eq.s32.totalorder %s21, 1
      %p81 = por %p79, %p80
      %p82 = scmp.ne.s32.totalorder %s73, %s74
      %p83 = scmp.eq.s32.totalorder %s21, 0
      %p84 = por %p82, %p83
      %p85 = scmp.ne.s32.totalorder %s73, %s74
      %p86 = scmp.eq.s32.totalorder %s22, 1
      %p87 = por %p85, %p86
      %p89 = scmp.ne.s32.totalorder %s74, %s88
      %p90 = scmp.eq.s32.totalorder %s22, 0
      %p91 = por %p89, %p90
      %s93 = sadd.s32 %s92, 1
      %p96 = scmp.eq.s32.totalorder %s16, 1
      %p97 = scmp.ne.s32.totalorder %s92, %s94
      %p98 = scmp.eq.s32.totalorder %s16, 0
      %p99 = por %p97, %p98
      %p100 = scmp.ne.s32.totalorder %s92, %s94
      %p101 = scmp.eq.s32.totalorder %s21, 1
      %p102 = por %p100, %p101
      %p103 = scmp.ne.s32.totalorder %s94, %s95
      %p104 = scmp.eq.s32.totalorder %s21, 0
      %p105 = por %p103, %p104
      %p106 = scmp.ne.s32.totalorder %s94, %s95
      %p107 = scmp.eq.s32.totalorder %s22, 1
      %p108 = por %p106, %p107
      %p110 = scmp.ne.s32.totalorder %s95, %s109
      %p111 = scmp.eq.s32.totalorder %s22, 0
      %p112 = por %p110, %p111
      %s114 = sadd.s32 %s113, 1
      %p117 = scmp.eq.s32.totalorder %s16, 1
      %p118 = scmp.ne.s32.totalorder %s113, %s115
      %p119 = scmp.eq.s32.totalorder %s16, 0
      %p120 = por %p118, %p119
      %p121 = scmp.ne.s32.totalorder %s113, %s115
      %p122 = scmp.eq.s32.totalorder %s21, 1
      %p123 = por %p121, %p122
      %p124 = scmp.ne.s32.totalorder %s115, %s116
      %p125 = scmp.eq.s32.totalorder %s21, 0
      %p126 = por %p124, %p125
      %p127 = scmp.ne.s32.totalorder %s115, %s116
      %p128 = scmp.eq.s32.totalorder %s22, 1
      %p129 = por %p127, %p128
      %p131 = scmp.ne.s32.totalorder %s116, %s130
      %p132 = scmp.eq.s32.totalorder %s22, 0
      %p133 = por %p131, %p132
      %s135 = sadd.s32 %s134, 1
      %p138 = scmp.eq.s32.totalorder %s16, 1
      %p139 = scmp.ne.s32.totalorder %s134, %s136
      %p140 = scmp.eq.s32.totalorder %s16, 0
      %p141 = por %p139, %p140
      %p142 = scmp.ne.s32.totalorder %s134, %s136
      %p143 = scmp.eq.s32.totalorder %s21, 1
      %p144 = por %p142, %p143
      %p145 = scmp.ne.s32.totalorder %s136, %s137
      %p146 = scmp.eq.s32.totalorder %s21, 0
      %p147 = por %p145, %p146
      %p148 = scmp.ne.s32.totalorder %s136, %s137
      %p149 = scmp.eq.s32.totalorder %s22, 1
      %p150 = por %p148, %p149
      %p152 = scmp.ne.s32.totalorder %s137, %s151
      %p153 = scmp.eq.s32.totalorder %s22, 0
      %p154 = por %p152, %p153
      %s156 = sadd.s32 %s155, 1
      %p159 = scmp.eq.s32.totalorder %s16, 1
      %p160 = scmp.ne.s32.totalorder %s155, %s157
      %p161 = scmp.eq.s32.totalorder %s16, 0
      %p162 = por %p160, %p161
      %p163 = scmp.ne.s32.totalorder %s155, %s157
      %p164 = scmp.eq.s32.totalorder %s21, 1
      %p165 = por %p163, %p164
      %p166 = scmp.ne.s32.totalorder %s157, %s158
      %p167 = scmp.eq.s32.totalorder %s21, 0
      %p168 = por %p166, %p167
      %p169 = scmp.ne.s32.totalorder %s157, %s158
      %p170 = scmp.eq.s32.totalorder %s22, 1
      %p171 = por %p169, %p170
      %p173 = scmp.ne.s32.totalorder %s158, %s172
      %p174 = scmp.eq.s32.totalorder %s22, 0
      %p175 = por %p173, %p174
      %s176 = ssub.s32 %s16, %s23
      %p177 = scmp.eq.s32.totalorder %s176, 0
      %s179 = sadd.s32 %s178, 1
      %s180 = scalar_select %p177, %s178, %s179
      %p183 = pneg %p177
      %p184 = scmp.eq.s32.totalorder %s16, 1
      %p185 = por %p183, %p184
      %p186 = scmp.ne.s32.totalorder %s178, %s181
      %p187 = scmp.eq.s32.totalorder %s16, 0
      %p188 = por %p186, %p187
      %p189 = scmp.ne.s32.totalorder %s178, %s181
      %p190 = scmp.eq.s32.totalorder %s21, 1
      %p191 = por %p189, %p190
      %p192 = scmp.ne.s32.totalorder %s181, %s182
      %p193 = scmp.eq.s32.totalorder %s21, 0
      %p194 = por %p192, %p193
      %p195 = scmp.ne.s32.totalorder %s181, %s182
      %p196 = scmp.eq.s32.totalorder %s22, 1
      %p197 = por %p195, %p196
      %p199 = scmp.ne.s32.totalorder %s182, %s198
      %p200 = scmp.eq.s32.totalorder %s22, 0
      %p201 = por %p199, %p200
      %p202 = scmp.le.s32.totalorder 1, %s16
      %p203 = scmp.lt.s32.totalorder %s16, 3
      %p204 = pnand %p202, %p203
      %p205 = pneg %p204
      // Predicated region
      $region9: #{tpu_custom_call.1} parent=5 // pred_check
        _
      $region10: #{tpu_custom_call.1} parent=5 // pred_check_branch
        %207 = sbr.rel (%p204) target = $region12
      $region11: #{tpu_custom_call.1} parent=5 // pred_region
        %s208 = ssub.s32 %s16, 1
        // Predicated region
        $region13: #{tpu_custom_call.1} parent=11 // pred_check
          %p209 = pneg %p63
        $region14: #{tpu_custom_call.1} parent=11 // pred_check_branch
          %211 = sbr.rel (%p209) target = $region16
        $region15: #{tpu_custom_call.1} parent=11 // pred_region
          _
        $region16: #{tpu_custom_call.1} parent=11 // pred_fallthru
          _
        // Predicated region
        $region17: #{tpu_custom_call.1} parent=11 // pred_check
          %p212 = pneg %p84
        $region18: #{tpu_custom_call.1} parent=11 // pred_check_branch
          %214 = sbr.rel (%p212) target = $region20
        $region19: #{tpu_custom_call.1} parent=11 // pred_region
          _
        $region20: #{tpu_custom_call.1} parent=11 // pred_fallthru
          _
        // Predicated region
        $region21: #{tpu_custom_call.1} parent=11 // pred_check
          %p215 = pneg %p105
        $region22: #{tpu_custom_call.1} parent=11 // pred_check_branch
          %217 = sbr.rel (%p215) target = $region24
        $region23: #{tpu_custom_call.1} parent=11 // pred_region
          _
        $region24: #{tpu_custom_call.1} parent=11 // pred_fallthru
          _
        // Predicated region
        $region25: #{tpu_custom_call.1} parent=11 // pred_check
          %p218 = pneg %p126
        $region26: #{tpu_custom_call.1} parent=11 // pred_check_branch
          %220 = sbr.rel (%p218) target = $region28
        $region27: #{tpu_custom_call.1} parent=11 // pred_region
          _
        $region28: #{tpu_custom_call.1} parent=11 // pred_fallthru
          _
        // Predicated region
        $region29: #{tpu_custom_call.1} parent=11 // pred_check
          %p221 = pneg %p147
        $region30: #{tpu_custom_call.1} parent=11 // pred_check_branch
          %223 = sbr.rel (%p221) target = $region32
        $region31: #{tpu_custom_call.1} parent=11 // pred_region
          _
        $region32: #{tpu_custom_call.1} parent=11 // pred_fallthru
          _
        // Predicated region
        $region33: #{tpu_custom_call.1} parent=11 // pred_check
          %p224 = pneg %p168
        $region34: #{tpu_custom_call.1} parent=11 // pred_check_branch
          %226 = sbr.rel (%p224) target = $region36
        $region35: #{tpu_custom_call.1} parent=11 // pred_region
          _
        $region36: #{tpu_custom_call.1} parent=11 // pred_fallthru
          _
      $region12: #{tpu_custom_call.1} parent=5 // pred_fallthru
        _
      %p227 = scmp.lt.s32.totalorder %s16, 2
      // Predicated region
      $region37: #{tpu_custom_call.1} parent=5 // pred_check
        %p228 = pneg %p227
      $region38: #{tpu_custom_call.1} parent=5 // pred_check_branch
        %230 = sbr.rel (%p228) target = $region40
      $region39: #{tpu_custom_call.1} parent=5 // pred_region
        // Predicated region
        $region41: #{tpu_custom_call.1} parent=39 // pred_check
          %p231 = pneg %p36
        $region42: #{tpu_custom_call.1} parent=39 // pred_check_branch
          %233 = sbr.rel (%p231) target = $region44
        $region43: #{tpu_custom_call.1} parent=39 // pred_region
          %s234 = smul.u32 2, %s16
          %p235 = scmp.lt.s32.totalorder %s234, 3
          %s236 = scalar_select %p235, %s234, 3
          %s237 = smul.addr %s236, 4
          %s238 = scalar_lea.vmem %s0, %s237
          %s239 = smul.u32 2, %s16
        $region44: #{tpu_custom_call.1} parent=39 // pred_fallthru
          _
      $region40: #{tpu_custom_call.1} parent=5 // pred_fallthru
        _
      %p240 = scmp.le.s32.totalorder 1, %s16
      %p241 = scmp.lt.s32.totalorder %s16, 3
      %p242 = pnand %p240, %p241
      %p243 = pneg %p242
      // Predicated region
      $region45: #{tpu_custom_call.1} parent=5 // pred_check
        _
      $region46: #{tpu_custom_call.1} parent=5 // pred_check_branch
        %245 = sbr.rel (%p242) target = $region48
      $region47: #{tpu_custom_call.1} parent=5 // pred_region
        %s246 = ssub.s32 %s16, 1
        %s247 = smul.u32 2, %s21
        %p248 = scmp.lt.s32.totalorder %s247, 3
        %s249 = scalar_select %p248, %s247, 3
        %s250 = smul.addr %s249, 4
        %s251 = scalar_lea.vmem %s0, %s250
        %p252 = pneg %p42
        %p253 = pneg %p39
        %p254 = pneg %p63
        %p255 = pneg %p60
        %p256 = pneg %p84
        %p257 = pneg %p81
        %p258 = pneg %p105
        %p259 = pneg %p102
        %p260 = pneg %p126
        %p261 = pneg %p123
        %p262 = pneg %p147
        %p263 = pneg %p144
        %p264 = pneg %p168
        %p265 = pneg %p165
        %p266 = pneg %p194
        %p267 = pneg %p191
        %s268 = sand.u32 %s181, 1
        %s269 = scalar_lea.sflag [#allocation3], %s268
        %s270 = sand.u32 %s181, 1
        %s271 = smul.addr %s270, 4
        %s272 = scalar_lea.vmem [#allocation2], %s271
        %s273 = smul.u32 2, %s21
        %p274 = scmp.lt.s32.totalorder %s273, 3
        %s275 = scalar_select %p274, %s273, 3
        %s276 = smul.addr %s275, 4
        %s277 = scalar_lea.vmem %s0, %s276
        %s278 = smul.u32 2, %s21
        %s279 = smul.u32 2, %s21
        %v281 = vld [vmem:[%s1] sm:$0xf]
        %v282 = vld [vmem:[%s1 + $0x4] sm:$0xf]
        %v283 = vld [vmem:[%s1 + $0x8] sm:$0xf]
        %v284 = vld [vmem:[%s1 + $0xc] sm:$0xf]
        %v285 = vld [vmem:[%s277] sm:$0xff]
        %v286 = vld [vmem:[%s2] sm:$0xff]
        %v287 = vld [vmem:[%s2 + $0x8] sm:$0xff]
        %v288 = vld [vmem:[%s2 + $0x10] sm:$0xff]
        %v289 = vld [vmem:[%s2 + $0x18] sm:$0xff]
        %291 = vset.pattern.permute.xlu0 0
        %292 = vperm.xlu0 %291, %v286
        %v293 = vpop.permute.xlu0 %292
        %296 = vset.pattern.permute.xlu0 0
        %297 = vperm.xlu0 %296, %v287
        %v298 = vpop.permute.xlu0 %297
        %301 = vset.pattern.permute.xlu0 0
        %302 = vperm.xlu0 %301, %v288
        %v303 = vpop.permute.xlu0 %302
        %306 = vset.pattern.permute.xlu0 0
        %307 = vperm.xlu0 %306, %v289
        %v308 = vpop.permute.xlu0 %307
        %v314 = vunpack.c.l.b16 %v281
        %v315 = vunpack.c.l.b16 %v282
        %v316 = vunpack.c.l.b16 %v283
        %v317 = vunpack.c.l.b16 %v284
        %v318 = vpack.c.b16 %v315, %v314
        %v319 = vpack.c.b16 %v317, %v316
        %v321 = vunpack.c.l.b16 %v285
        %v322 = vunpack.c.h.b16 %v285
        %v323 = vpack.c.b16 %v321, %v321
        %v324 = vpack.c.b16 %v322, %v322
        %vm325 = vcmask 64512
        %v327 = vsel %vm325, %v318, 0
        %v330 = vsel %vm325, %v319, 0
        %vm332 = vcmask 1043456
        %v334 = vsel %vm332, %v323, 0
        %v337 = vsel %vm332, %v324, 0
        %339 = vmatprep.subr.bf16.mxu0 %v337
        %340 = vmatpush1.bf16.msra.mxu0 %v334
        %341 = vmatprep.subr.bf16.mxu0 0
        %342 = vmatpush1.bf16.msra.mxu0 0
        %343 = vmatprep.subr.bf16.mxu0 0
        %344 = vmatpush1.bf16.msra.mxu0 0
        %345 = vmatprep.subr.bf16.mxu0 0
        %346 = vmatpush1.bf16.msra.mxu0 0
        %347 = vmatprep.subr.bf16.mxu0 0
        %348 = vmatpush1.bf16.msra.mxu0 0
        %349 = vmatprep.subr.bf16.mxu0 0
        %350 = vmatpush1.bf16.msra.mxu0 0
        %351 = vmatprep.subr.bf16.mxu0 0
        %352 = vmatpush1.bf16.msra.mxu0 0
        %353 = vmatprep.subr.bf16.mxu0 0
        %354 = vmatpush1.bf16.msra.mxu0 0
        %355 = vmatprep.subr.bf16.mxu0 0
        %356 = vmatpush1.bf16.msra.mxu0 0
        %357 = vmatprep.subr.bf16.mxu0 0
        %358 = vmatpush1.bf16.msra.mxu0 0
        %359 = vmatprep.subr.bf16.mxu0 0
        %360 = vmatpush1.bf16.msra.mxu0 0
        %361 = vmatprep.subr.bf16.mxu0 0
        %362 = vmatpush1.bf16.msra.mxu0 0
        %363 = vmatprep.subr.bf16.mxu0 0
        %364 = vmatpush1.bf16.msra.mxu0 0
        %365 = vmatprep.subr.bf16.mxu0 0
        %366 = vmatpush1.bf16.msra.mxu0 0
        %367 = vmatprep.subr.bf16.mxu0 0
        %368 = vmatpush1.bf16.msra.mxu0 0
        %369 = vmatprep.subr.bf16.mxu0 0
        %370 = vmatpush1.bf16.msra.mxu0 0
        %371 = vmatprep.mubr.bf16.mxu0 0
        %372 = vmatmul.mubr.bf16.gmra.mrb[0].mxu0 %v327
        %v373 = vpop.f32.mrb[0].mxu0
        %v374 = vadd.f32 %v293, %v373
        %v375 = vpop.f32.mrb[0].mxu0
        %v376 = vadd.f32 %v293, %v375
        %v377 = vpop.f32.mrb[0].mxu0
        %v378 = vadd.f32 %v298, %v377
        %v379 = vpop.f32.mrb[0].mxu0
        %v380 = vadd.f32 %v298, %v379
        %381 = vmatprep.mubr.bf16.mxu0 0
        %382 = vmatmul.mubr.bf16.gmra.mrb[0].mxu0 %v330
        %v383 = vpop.f32.mrb[0].mxu0
        %v384 = vadd.f32 %v303, %v383
        %v385 = vpop.f32.mrb[0].mxu0
        %v386 = vadd.f32 %v303, %v385
        %v387 = vpop.f32.mrb[0].mxu0
        %v388 = vadd.f32 %v308, %v387
        %v389 = vpop.f32.mrb[0].mxu0
        %v390 = vadd.f32 %v308, %v389
        %391 = vdwg.mxu0
        %v392 = vmax.f32 %v374, 0.0
        %v393 = vmax.f32 %v376, 0.0
        %v394 = vmax.f32 %v378, 0.0
        %v395 = vmax.f32 %v380, 0.0
        %v396 = vmax.f32 %v384, 0.0
        %v397 = vmax.f32 %v386, 0.0
        %v398 = vmax.f32 %v388, 0.0
        %v399 = vmax.f32 %v390, 0.0
        %v400 = vld [vmem:[%s3] sm:$0xf]
        %v401 = vld [vmem:[%s3 + $0x4] sm:$0xf]
        %v402 = vld [vmem:[%s3 + $0x8] sm:$0xf]
        %v403 = vld [vmem:[%s3 + $0xc] sm:$0xf]
        %v404 = vpack.c.bf16 %v394, %v392
        %v405 = vpack.c.bf16 %v395, %v393
        %v406 = vpack.c.bf16 %v398, %v396
        %v407 = vpack.c.bf16 %v399, %v397
        %v408 = vld [vmem:[%s4] sm:$0xff]
        %v409 = vld [vmem:[%s4 + $0x8] sm:$0xff]
        %v410 = vld [vmem:[%s4 + $0x10] sm:$0xff]
        %v411 = vld [vmem:[%s4 + $0x18] sm:$0xff]
        %413 = vset.pattern.permute.xlu0 0
        %414 = vperm.xlu0 %413, %v408
        %v415 = vpop.permute.xlu0 %414
        %418 = vset.pattern.permute.xlu0 0
        %419 = vperm.xlu0 %418, %v409
        %v420 = vpop.permute.xlu0 %419
        %423 = vset.pattern.permute.xlu0 0
        %424 = vperm.xlu0 %423, %v410
        %v425 = vpop.permute.xlu0 %424
        %428 = vset.pattern.permute.xlu0 0
        %429 = vperm.xlu0 %428, %v411
        %v430 = vpop.permute.xlu0 %429
        %v436 = vunpack.c.l.b16 %v400
        %v437 = vunpack.c.l.b16 %v401
        %v438 = vunpack.c.l.b16 %v402
        %v439 = vunpack.c.l.b16 %v403
        %v440 = vpack.c.b16 %v437, %v436
        %v441 = vpack.c.b16 %v439, %v438
        %vm442 = vcmask 261120
        %v444 = vsel %vm442, %v440, 0
        %v447 = vsel %vm442, %v441, 0
        %449 = vmatprep.subr.bf16.mxu0 %v405
        %450 = vmatpush1.bf16.msra.mxu0 %v404
        %451 = vmatprep.subr.bf16.mxu0 %v407
        %452 = vmatpush1.bf16.msra.mxu0 %v406
        %453 = vmatprep.subr.bf16.mxu0 0
        %454 = vmatpush1.bf16.msra.mxu0 0
        %455 = vmatprep.subr.bf16.mxu0 0
        %456 = vmatpush1.bf16.msra.mxu0 0
        %457 = vmatprep.subr.bf16.mxu0 0
        %458 = vmatpush1.bf16.msra.mxu0 0
        %459 = vmatprep.subr.bf16.mxu0 0
        %460 = vmatpush1.bf16.msra.mxu0 0
        %461 = vmatprep.subr.bf16.mxu0 0
        %462 = vmatpush1.bf16.msra.mxu0 0
        %463 = vmatprep.subr.bf16.mxu0 0
        %464 = vmatpush1.bf16.msra.mxu0 0
        %465 = vmatprep.subr.bf16.mxu0 0
        %466 = vmatpush1.bf16.msra.mxu0 0
        %467 = vmatprep.subr.bf16.mxu0 0
        %468 = vmatpush1.bf16.msra.mxu0 0
        %469 = vmatprep.subr.bf16.mxu0 0
        %470 = vmatpush1.bf16.msra.mxu0 0
        %471 = vmatprep.subr.bf16.mxu0 0
        %472 = vmatpush1.bf16.msra.mxu0 0
        %473 = vmatprep.subr.bf16.mxu0 0
        %474 = vmatpush1.bf16.msra.mxu0 0
        %475 = vmatprep.subr.bf16.mxu0 0
        %476 = vmatpush1.bf16.msra.mxu0 0
        %477 = vmatprep.subr.bf16.mxu0 0
        %478 = vmatpush1.bf16.msra.mxu0 0
        %479 = vmatprep.subr.bf16.mxu0 0
        %480 = vmatpush1.bf16.msra.mxu0 0
        %481 = vmatprep.mubr.bf16.mxu0 0
        %482 = vmatmul.mubr.bf16.gmra.mrb[0].mxu0 %v444
        %v483 = vpop.f32.mrb[0].mxu0
        %v484 = vadd.f32 %v415, %v483
        %v485 = vpop.f32.mrb[0].mxu0
        %v486 = vadd.f32 %v415, %v485
        %v487 = vpop.f32.mrb[0].mxu0
        %v488 = vadd.f32 %v420, %v487
        %v489 = vpop.f32.mrb[0].mxu0
        %v490 = vadd.f32 %v420, %v489
        %491 = vmatprep.mubr.bf16.mxu0 0
        %492 = vmatmul.mubr.bf16.gmra.mrb[0].mxu0 %v447
        %v493 = vpop.f32.mrb[0].mxu0
        %v494 = vadd.f32 %v425, %v493
        %v495 = vpop.f32.mrb[0].mxu0
        %v496 = vadd.f32 %v425, %v495
        %v497 = vpop.f32.mrb[0].mxu0
        %v498 = vadd.f32 %v430, %v497
        %v499 = vpop.f32.mrb[0].mxu0
        %v500 = vadd.f32 %v430, %v499
        %501 = vdwg.mxu0
        %v502 = vmax.f32 %v484, 0.0
        %v503 = vmax.f32 %v486, 0.0
        %v504 = vmax.f32 %v488, 0.0
        %v505 = vmax.f32 %v490, 0.0
        %v506 = vmax.f32 %v494, 0.0
        %v507 = vmax.f32 %v496, 0.0
        %v508 = vmax.f32 %v498, 0.0
        %v509 = vmax.f32 %v500, 0.0
        %v510 = vld [vmem:[%s5] sm:$0x1]
        %v511 = vpack.c.bf16 %v504, %v502
        %v512 = vpack.c.bf16 %v505, %v503
        %v513 = vpack.c.bf16 %v508, %v506
        %v514 = vpack.c.bf16 %v509, %v507
        %v515 = vld [vmem:[%s6] sm:$0x3]
        %517 = vset.pattern.permute.xlu0 0
        %518 = vperm.xlu0 %517, %v515
        %v519 = vpop.permute.xlu0 %518
        %v522 = vsel %vm442, %v510, 0
        %524 = vmatprep.subr.bf16.mxu0 %v512
        %525 = vmatpush1.bf16.msra.mxu0 %v511
        %526 = vmatprep.subr.bf16.mxu0 %v514
        %527 = vmatpush1.bf16.msra.mxu0 %v513
        %528 = vmatprep.subr.bf16.mxu0 0
        %529 = vmatpush1.bf16.msra.mxu0 0
        %530 = vmatprep.subr.bf16.mxu0 0
        %531 = vmatpush1.bf16.msra.mxu0 0
        %532 = vmatprep.subr.bf16.mxu0 0
        %533 = vmatpush1.bf16.msra.mxu0 0
        %534 = vmatprep.subr.bf16.mxu0 0
        %535 = vmatpush1.bf16.msra.mxu0 0
        %536 = vmatprep.subr.bf16.mxu0 0
        %537 = vmatpush1.bf16.msra.mxu0 0
        %538 = vmatprep.subr.bf16.mxu0 0
        %539 = vmatpush1.bf16.msra.mxu0 0
        %540 = vmatprep.subr.bf16.mxu0 0
        %541 = vmatpush1.bf16.msra.mxu0 0
        %542 = vmatprep.subr.bf16.mxu0 0
        %543 = vmatpush1.bf16.msra.mxu0 0
        %544 = vmatprep.subr.bf16.mxu0 0
        %545 = vmatpush1.bf16.msra.mxu0 0
        %546 = vmatprep.subr.bf16.mxu0 0
        %547 = vmatpush1.bf16.msra.mxu0 0
        %548 = vmatprep.subr.bf16.mxu0 0
        %549 = vmatpush1.bf16.msra.mxu0 0
        %550 = vmatprep.subr.bf16.mxu0 0
        %551 = vmatpush1.bf16.msra.mxu0 0
        %552 = vmatprep.subr.bf16.mxu0 0
        %553 = vmatpush1.bf16.msra.mxu0 0
        %554 = vmatprep.subr.bf16.mxu0 0
        %555 = vmatpush1.bf16.msra.mxu0 0
        %556 = vmatprep.mubr.bf16.mxu0 0
        %557 = vmatmul.mubr.bf16.gmra.mrb[0].mxu0 %v522
        %v558 = vpop.f32.mrb[0].mxu0
        %v559 = vadd.f32 %v519, %v558
        %v560 = vpop.f32.mrb[0].mxu0
        %v561 = vadd.f32 %v519, %v560
        %v562 = vpop.f32.mrb[0].mxu0
        %v563 = vpop.f32.mrb[0].mxu0
        %564 = vdwg.mxu0
        %v567 = vcombine.low %v559, %v561
        %v569 = vunpack.c.l.s4 1983009808
        %v570 = vunpack.c.0.s8 %v569
        %v571 = vlaneseq
        %v572 = vshrl.u32 %v571, 7
        %v573 = vsub.s32 %v570, %v572
        %v574 = vrot.slane %v567, %v573
        %576 = vst [vmem:[%s272] sm:$0xf] %v574
        %s577 = sand.u32 %s181, 1
        %s578 = scalar_lea.sflag [#allocation3], %s577
        %s579 = sand.u32 %s181, 1
        %s580 = smul.addr %s579, 4
        %s581 = scalar_lea.vmem [#allocation2], %s580
        // Predicated region
        $region49: #{tpu_custom_call.1} parent=47 // pred_check
          %p582 = pneg %p191
        $region50: #{tpu_custom_call.1} parent=47 // pred_check_branch
          %584 = sbr.rel (%p582) target = $region52
        $region51: #{tpu_custom_call.1} parent=47 // pred_region
          %s585 = smul.u32 2, %s21
          %s587 = ssub.s32 64, 64
          %588 = vsyncadd %s578, %s587
          %s589 = smul.addr %s585, 32
          %s590 = scalar_lea.hbm %s7, %s589
          %s592 = sshll.u32 %s581, 4
          %s593 = int_to_ptr.vmem [resolvable:$true] %s592
          %595 = dma.vmem_to_hbm [thread:$0]  %s593, 64, %s590, %s578
        $region52: #{tpu_custom_call.1} parent=47 // pred_fallthru
          _
      $region48: #{tpu_custom_call.1} parent=5 // pred_fallthru
        _
      %p596 = scmp.le.s32.totalorder 2, %s16
      // Predicated region
      $region53: #{tpu_custom_call.1} parent=5 // pred_check
        %p597 = pneg %p596
      $region54: #{tpu_custom_call.1} parent=5 // pred_check_branch
        %599 = sbr.rel (%p597) target = $region56
      $region55: #{tpu_custom_call.1} parent=5 // pred_region
        %s600 = ssub.s32 %s16, 2
        // Predicated region
        $region57: #{tpu_custom_call.1} parent=55 // pred_check
          %p601 = pneg %p197
        $region58: #{tpu_custom_call.1} parent=55 // pred_check_branch
          %603 = sbr.rel (%p601) target = $region60
        $region59: #{tpu_custom_call.1} parent=55 // pred_region
          %s604 = sand.u32 %s182, 1
          %s605 = scalar_lea.sflag [#allocation3], %s604
          %s606 = sand.u32 %s182, 1
          %s607 = smul.addr %s606, 4
          %s608 = scalar_lea.vmem [#allocation2], %s607
          %609 = dma.done %s605, 64
        $region60: #{tpu_custom_call.1} parent=55 // pred_fallthru
          _
      $region56: #{tpu_custom_call.1} parent=5 // pred_fallthru
        _
    $region6: #{tpu_custom_call.1} parent=1 // loop_footer
      %s20 = sadd.s32 1, %s16
    $region7: #{tpu_custom_call.1} parent=1 // loop_footer_branch
      %15 = sbr.rel target = $region3
    $region8: #{tpu_custom_call.1} parent=1 // loop_exit
      _
    %610 = vsyncpa [#allocation3], 1
    %s611 = scalar_lea.sflag [#allocation3], 1
    %612 = vsyncpa %s611, 1

</llo_original>
